<compile_context>
chip_gen: v7x
topology: tpu7x:2x2x1
jax: 0.10.0
libtpu: 0.0.40
codegen_flags: <defaults>
</compile_context>

<pallas_src>
import functools

import jax
import jax.numpy as jnp
from jax.experimental import pallas as pl
from jax.experimental.pallas import tpu as pltpu


def _reduce_dim0_kernel(x_ref, o_ref, acc_ref, *, scale: float):
    """Accumulate one (TT, Bt, Dt) input block per grid step into f32 scratch."""
    t = pl.program_id(1)
    n_t = pl.num_programs(1)

    @pl.when(t == 0)
    def _():
        acc_ref[...] = jnp.zeros_like(acc_ref)

    # Vreg-resident partial sum over the TT axis, then a single accumulator RMW.
    acc_ref[...] += jnp.sum(x_ref[...].astype(jnp.float32), axis=0)

    @pl.when(t == n_t - 1)
    def _():
        acc = acc_ref[...]
        if scale != 1.0:          # compile-time constant branch
            acc = acc * scale
        o_ref[...] = acc.astype(o_ref.dtype)


def _round_up(a: int, b: int) -> int:
    return ((a + b - 1) // b) * b


def reduce_dim0(x, *, average_output: bool = True,
                force_pallas: bool = False,
                min_pallas_bytes: int = 1 << 20):
    """Pallas equivalent of OutputDataToSpikingPerceptronLayer(average_output).forward(x).

    NOTE: mirrors the PyTorch code verbatim: average_output=True -> sum,
          average_output=False -> mean (yes, the module is written that way).
    """
    if isinstance(x, (list, tuple)):
        x = jnp.stack([jnp.asarray(xi) for xi in x])  # torch.stack equivalent
    x = jnp.asarray(x)
    assert x.ndim >= 1, "need at least a leading axis to reduce"

    T = x.shape[0]
    out_shape = x.shape[1:]
    mean = not average_output  # PyTorch module: True -> sum, False -> mean

    def _jnp_reduce(v):
        return jnp.mean(v, axis=0) if mean else jnp.sum(v, axis=0)

    # Guards / fast paths:
    #  - integer dtypes: f32 accumulation would change exactness/wraparound
    #  - degenerate shapes
    #  - tiny inputs: fixed pallas_call overhead would dominate
    if not jnp.issubdtype(x.dtype, jnp.floating):
        return _jnp_reduce(x)
    if T == 0 or x.size == 0:
        return _jnp_reduce(x)
    if (not force_pallas) and x.size * x.dtype.itemsize < min_pallas_bytes:
        return _jnp_reduce(x)

    # ---- flatten trailing dims and choose a lane-dense 2-D tiling ----
    M = 1
    for s in out_shape:
        M *= s
    x2 = x.reshape(T, M)

    # Lane width: prefer 512, fall back if padding would exceed ~12.5%.
    D_ = 128
    M_pad = _round_up(M, 128 * 8)
    for d in (512, 256, 128):
        m_pad = _round_up(M, d * 8)
        if (m_pad - M) <= max(M // 8, 0) or d == 128:
            D_, M_pad = d, m_pad
            break
    if M_pad != M:
        x2 = jnp.pad(x2, ((0, 0), (0, M_pad - M)))
    Bp = M_pad // D_                      # multiple of 8 by construction
    x3 = x2.reshape(T, Bp, D_)

    # Sublane tile: largest of (128..8) that divides Bp.
    Bt = 8
    for b in (128, 64, 32, 16, 8):
        if Bp % b == 0:
            Bt = b
            break

    # T blocking: keep each input block <= ~4 MiB (double-buffered inputs stay
    # inside v7x's scoped VMEM); prefer a divisor of T to avoid padding a copy.
    itemsize = x.dtype.itemsize
    slice_bytes = Bt * D_ * itemsize
    TT_cap = max(1, min(16, (4 << 20) // slice_bytes))
    TT = min(TT_cap, T)
    div = 1
    for cand in range(TT, 0, -1):
        if T % cand == 0:
            div = cand
            break
    if div * 2 >= TT:
        TT = div
    T_pad = _round_up(T, TT)
    if T_pad != T:
        # zero padding along T: does not change the sum; mean uses 1/T below
        x3 = jnp.pad(x3, ((0, T_pad - T), (0, 0), (0, 0)))

    scale = (1.0 / T) if mean else 1.0
    kernel = functools.partial(_reduce_dim0_kernel, scale=scale)
    out_dtype = x.dtype

    # VMEM budget: double-buffered input + f32 accumulator + output buffers.
    vmem_bytes = (2 * TT * Bt * D_ * itemsize
                  + Bt * D_ * 4
                  + 2 * Bt * D_ * jnp.dtype(out_dtype).itemsize
                  + (4 << 20))            # headroom for compiler scratch
    vmem_limit = int(min(max(vmem_bytes, 16 << 20), 32 << 20))

    out2d = pl.pallas_call(
        kernel,
        out_shape=jax.ShapeDtypeStruct((Bp, D_), out_dtype),
        grid_spec=pltpu.PrefetchScalarGridSpec(
            num_scalar_prefetch=0,
            grid=(Bp // Bt, T_pad // TT),            # reduction axis last
            in_specs=[pl.BlockSpec((TT, Bt, D_), lambda i, t: (t, i, 0))],
            # Same output block for every t -> resident across the reduction;
            # written to HBM once, on the last T step (cast done in-kernel).
            out_specs=pl.BlockSpec((Bt, D_), lambda i, t: (i, 0)),
            scratch_shapes=[pltpu.VMEM((Bt, D_), jnp.float32)],
        ),
        compiler_params=pltpu.CompilerParams(
            dimension_semantics=("parallel", "arbitrary"),
            vmem_limit_bytes=vmem_limit,
        ),
    )(x3)

    out_flat = out2d.reshape(-1)
    if M_pad != M:
        out_flat = out_flat[:M]
    return out_flat.reshape(out_shape)


if __name__ == "__main__":
    key = jax.random.PRNGKey(0)

    # Small "spiking" shapes: 8 timesteps, batch 16, hidden 256.
    T, B, D = 8, 16, 256
    x = jax.random.normal(key, (T, B, D), dtype=jnp.float32)

    # Default module config: average_output=True -> SUM over dim 0.
    y_sum = jax.block_until_ready(
        reduce_dim0(x, average_output=True, force_pallas=True))
    assert jnp.allclose(y_sum, jnp.sum(x, axis=0), atol=1e-4, rtol=1e-4)

    # Other branch: average_output=False -> MEAN over dim 0.
    y_mean = jax.block_until_ready(
        reduce_dim0(x, average_output=False, force_pallas=True))
    assert jnp.allclose(y_mean, jnp.mean(x, axis=0), atol=1e-4, rtol=1e-4)

    # List input path (torch.stack behaviour).
    y_list = jax.block_until_ready(
        reduce_dim0([x[i] for i in range(T)], average_output=True,
                    force_pallas=True))
    assert jnp.allclose(y_list, jnp.sum(x, axis=0), atol=1e-4, rtol=1e-4)

    # Ragged shape + bf16: exercises lane padding and the in-kernel cast.
    x2 = jax.random.normal(jax.random.PRNGKey(0), (10, 12, 200),
                           dtype=jnp.bfloat16)
    y2 = jax.block_until_ready(
        reduce_dim0(x2, average_output=True, force_pallas=True))
    ref2 = jnp.sum(x2.astype(jnp.float32), axis=0)
    assert jnp.allclose(y2.astype(jnp.float32), ref2, atol=1e-1, rtol=1e-1)

    print("KERNEL_OK")
</pallas_src>

<mosaic_0001>
module attributes {stable_mosaic.version = 11 : i64} {
  func.func @_reduce_dim0_kernel(%arg0: i32, %arg1: i32, %arg2: memref<8x8x512xf32, #tpu.memory_space<vmem>>, %arg3: memref<8x512xf32, #tpu.memory_space<vmem>>, %arg4: memref<8x512xf32, #tpu.memory_space<vmem>>) attributes {dimension_semantics = [#tpu.dimension_semantics<parallel>, #tpu.dimension_semantics<arbitrary>], iteration_bounds = array<i64: 1, 1>, scalar_prefetch = 0 : i64, scratch_operands = 1 : i64, tpu.core_type = #tpu.core_type<tc>, window_params = [{transform_indices = @transform_0, window_bounds = array<i64: 8, 8, 512>}, {transform_indices = @transform_1, window_bounds = array<i64: 8, 512>}]} {
    %c0_i32 = arith.constant 0 : i32
    %0 = arith.cmpi eq, %arg1, %c0_i32 : i32
    %1 = arith.extui %0 : i1 to i32
    %c0_i32_0 = arith.constant 0 : i32
    %2 = arith.cmpi ne, %1, %c0_i32_0 : i32
    scf.if %2 {
      %cst_9 = arith.constant 0.000000e+00 : f32
      %11 = vector.broadcast %cst_9 : f32 to vector<8x512xf32>
      %c0_10 = arith.constant 0 : index
      %c0_11 = arith.constant 0 : index
      %12 = vector.load %arg4[%c0_10, %c0_11] : memref<8x512xf32, #tpu.memory_space<vmem>>, vector<8x512xf32>
      tpu.vector_store %arg4[%c0_10, %c0_11], %11 {strides = array<i32>} : memref<8x512xf32, #tpu.memory_space<vmem>>, vector<8x512xf32>,
    } else {
    }
    %c0 = arith.constant 0 : index
    %c0_1 = arith.constant 0 : index
    %3 = vector.load %arg4[%c0, %c0_1] : memref<8x512xf32, #tpu.memory_space<vmem>>, vector<8x512xf32>
    %c0_2 = arith.constant 0 : index
    %c0_3 = arith.constant 0 : index
    %c0_4 = arith.constant 0 : index
    %4 = vector.load %arg2[%c0_2, %c0_3, %c0_4] : memref<8x8x512xf32, #tpu.memory_space<vmem>>, vector<8x8x512xf32>
    %cst = arith.constant dense<0.000000e+00> : vector<8x512xf32>
    %5 = vector.multi_reduction <add>, %4, %cst [0] : vector<8x8x512xf32> to vector<8x512xf32>
    %6 = arith.addf %3, %5 : vector<8x512xf32>
    %c0_5 = arith.constant 0 : index
    %c0_6 = arith.constant 0 : index
    %7 = vector.load %arg4[%c0_5, %c0_6] : memref<8x512xf32, #tpu.memory_space<vmem>>, vector<8x512xf32>
    tpu.vector_store %arg4[%c0_5, %c0_6], %6 {strides = array<i32>} : memref<8x512xf32, #tpu.memory_space<vmem>>, vector<8x512xf32>,
    %c0_i32_7 = arith.constant 0 : i32
    %8 = arith.cmpi eq, %arg1, %c0_i32_7 : i32
    %9 = arith.extui %8 : i1 to i32
    %c0_i32_8 = arith.constant 0 : i32
    %10 = arith.cmpi ne, %9, %c0_i32_8 : i32
    scf.if %10 {
      %c0_9 = arith.constant 0 : index
      %c0_10 = arith.constant 0 : index
      %11 = vector.load %arg4[%c0_9, %c0_10] : memref<8x512xf32, #tpu.memory_space<vmem>>, vector<8x512xf32>
      %c0_11 = arith.constant 0 : index
      %c0_12 = arith.constant 0 : index
      %12 = vector.load %arg3[%c0_11, %c0_12] : memref<8x512xf32, #tpu.memory_space<vmem>>, vector<8x512xf32>
      tpu.vector_store %arg3[%c0_11, %c0_12], %11 {strides = array<i32>} : memref<8x512xf32, #tpu.memory_space<vmem>>, vector<8x512xf32>,
    } else {
    }
    return
  }
  func.func @transform_0(%arg0: i32, %arg1: i32) -> (i32, i32, i32) {
    %c0_i32 = arith.constant 0 : i32
    %c0_i32_0 = arith.constant 0 : i32
    return %arg1, %arg0, %c0_i32 : i32, i32, i32
  }
  func.func @transform_1(%arg0: i32, %arg1: i32) -> (i32, i32) {
    %c0_i32 = arith.constant 0 : i32
    %c0_i32_0 = arith.constant 0 : i32
    return %arg0, %c0_i32 : i32, i32
  }
}

</mosaic_0001>

<llo_original>
// kernel: tpu_custom_call.1
$region0: #{tpu_custom_call.1}
  #allocation0 [shape = 'u32[]', space=smem, size = 0x4, offset = 0x4, fixed_abs, tag = 'smem constant byte address 0x4 - core index']
  #allocation1 [shape = 'u32[144,128]{1,0:T(1,128)}', space=vmem, size = 0x12000, scoped, tag = 'internal scratch']
  #allocation2 [shape = 'f32[8,512]{1,0:T(8,128)}', space=vmem, size = 0x4000, scoped, tag = 'scratch operand']
  %s0 = inlined_call_operand.hbm [shape: f32[8,8,512], index: 0, kind: input, shape index: {}]
  %s1 = inlined_call_operand.hbm [shape: f32[8,512], index: 1, kind: output, shape index: {}]
  %s2 = sld [smem:[#allocation0]]
  $region26: #{tpu_custom_call.1} parent=0
    _
  %s4 = ssub.s32 1, %s2
  %s5 = scalar_select 0, %s4, %s2
  $region1: #{tpu_custom_call.1} parent=0
    #allocation3 [shape = 'u8[131072]{0}', space=vmem, size = 0x20000, scoped, tag = 'input window, operand 0, single buffered']
    #allocation4 [shape = 's32[1]{0}', space=sflag, size = 0x4, scoped, tag = 'scoped memory for tpu_custom_call.1']
    #allocation5 [shape = 's32[1]{0}', space=sflag, size = 0x4, scoped, tag = 'scoped memory for tpu_custom_call.1']
    #allocation6 [shape = 'u8[16384]{0}', space=vmem, size = 0x4000, scoped, tag = 'output window, operand 0, single buffered']
    %6 = vsyncpa [#allocation4], 0
    %7 = vsyncpa [#allocation5], 0
    // Predicated region
    $region2: #{tpu_custom_call.1} parent=1 // pred_check
      _
    $region3: #{tpu_custom_call.1} parent=1 // pred_check_branch
      %9 = sbr.rel (0) target = $region5
    $region4: #{tpu_custom_call.1} parent=1 // pred_region
      %s11 = ssub.s32 4096, 4096
      %12 = vsyncadd [#allocation4], %s11
      %s13 = sshll.u32 [#allocation3], 4
      %s14 = int_to_ptr.vmem [resolvable:$true] %s13
      %19 = dma.hbm_to_vmem [thread:$0]  %s0, 4096, %s14, [#allocation4], 512, 512, 32
    $region5: #{tpu_custom_call.1} parent=1 // pred_fallthru
      _
    // Predicated region
    $region6: #{tpu_custom_call.1} parent=1 // pred_check
      _
    $region7: #{tpu_custom_call.1} parent=1 // pred_check_branch
      %21 = sbr.rel (0) target = $region9
    $region8: #{tpu_custom_call.1} parent=1 // pred_region
      %22 = dma.done [#allocation4], 4096
    $region9: #{tpu_custom_call.1} parent=1 // pred_fallthru
      _
    %p23 = scmp.eq.s32.totalorder 0, 0
    // Predicated region
    $region10: #{tpu_custom_call.1} parent=1 // pred_check
      %p24 = pneg %p23
    $region11: #{tpu_custom_call.1} parent=1 // pred_check_branch
      %26 = sbr.rel (%p24) target = $region13
    $region12: #{tpu_custom_call.1} parent=1 // pred_region
      %27 = vst [vmem:[#allocation2] sm:$0xff] 0.0
      %28 = vst [vmem:[#allocation2 + $0x8] sm:$0xff] 0.0
      %29 = vst [vmem:[#allocation2 + $0x10] sm:$0xff] 0.0
      %30 = vst [vmem:[#allocation2 + $0x18] sm:$0xff] 0.0
    $region13: #{tpu_custom_call.1} parent=1 // pred_fallthru
      _
    %v31 = vld [vmem:[#allocation2] sm:$0xff]
    %v32 = vld [vmem:[#allocation2 + $0x8] sm:$0xff]
    %v33 = vld [vmem:[#allocation2 + $0x10] sm:$0xff]
    %v34 = vld [vmem:[#allocation2 + $0x18] sm:$0xff]
    %v35 = vld [vmem:[#allocation3] sm:$0xff]
    %v36 = vld [vmem:[#allocation3 + $0x8] sm:$0xff]
    %v37 = vld [vmem:[#allocation3 + $0x10] sm:$0xff]
    %v38 = vld [vmem:[#allocation3 + $0x18] sm:$0xff]
    %v39 = vld [vmem:[#allocation3 + $0x20] sm:$0xff]
    %v40 = vld [vmem:[#allocation3 + $0x28] sm:$0xff]
    %v41 = vld [vmem:[#allocation3 + $0x30] sm:$0xff]
    %v42 = vld [vmem:[#allocation3 + $0x38] sm:$0xff]
    %v43 = vld [vmem:[#allocation3 + $0x40] sm:$0xff]
    %v44 = vld [vmem:[#allocation3 + $0x48] sm:$0xff]
    %v45 = vld [vmem:[#allocation3 + $0x50] sm:$0xff]
    %v46 = vld [vmem:[#allocation3 + $0x58] sm:$0xff]
    %v47 = vld [vmem:[#allocation3 + $0x60] sm:$0xff]
    %v48 = vld [vmem:[#allocation3 + $0x68] sm:$0xff]
    %v49 = vld [vmem:[#allocation3 + $0x70] sm:$0xff]
    %v50 = vld [vmem:[#allocation3 + $0x78] sm:$0xff]
    %v51 = vld [vmem:[#allocation3 + $0x80] sm:$0xff]
    %v52 = vld [vmem:[#allocation3 + $0x88] sm:$0xff]
    %v53 = vld [vmem:[#allocation3 + $0x90] sm:$0xff]
    %v54 = vld [vmem:[#allocation3 + $0x98] sm:$0xff]
    %v55 = vld [vmem:[#allocation3 + $0xa0] sm:$0xff]
    %v56 = vld [vmem:[#allocation3 + $0xa8] sm:$0xff]
    %v57 = vld [vmem:[#allocation3 + $0xb0] sm:$0xff]
    %v58 = vld [vmem:[#allocation3 + $0xb8] sm:$0xff]
    %v59 = vld [vmem:[#allocation3 + $0xc0] sm:$0xff]
    %v60 = vld [vmem:[#allocation3 + $0xc8] sm:$0xff]
    %v61 = vld [vmem:[#allocation3 + $0xd0] sm:$0xff]
    %v62 = vld [vmem:[#allocation3 + $0xd8] sm:$0xff]
    %v63 = vld [vmem:[#allocation3 + $0xe0] sm:$0xff]
    %v64 = vld [vmem:[#allocation3 + $0xe8] sm:$0xff]
    %v65 = vld [vmem:[#allocation3 + $0xf0] sm:$0xff]
    %v66 = vld [vmem:[#allocation3 + $0xf8] sm:$0xff]
    %v67 = vadd.f32 %v35, %v39
    %v68 = vadd.f32 %v67, %v43
    %v69 = vadd.f32 %v68, %v47
    %v70 = vadd.f32 %v69, %v51
    %v71 = vadd.f32 %v70, %v55
    %v72 = vadd.f32 %v71, %v59
    %v73 = vadd.f32 %v72, %v63
    %v74 = vadd.f32 %v36, %v40
    %v75 = vadd.f32 %v74, %v44
    %v76 = vadd.f32 %v75, %v48
    %v77 = vadd.f32 %v76, %v52
    %v78 = vadd.f32 %v77, %v56
    %v79 = vadd.f32 %v78, %v60
    %v80 = vadd.f32 %v79, %v64
    %v81 = vadd.f32 %v37, %v41
    %v82 = vadd.f32 %v81, %v45
    %v83 = vadd.f32 %v82, %v49
    %v84 = vadd.f32 %v83, %v53
    %v85 = vadd.f32 %v84, %v57
    %v86 = vadd.f32 %v85, %v61
    %v87 = vadd.f32 %v86, %v65
    %v88 = vadd.f32 %v38, %v42
    %v89 = vadd.f32 %v88, %v46
    %v90 = vadd.f32 %v89, %v50
    %v91 = vadd.f32 %v90, %v54
    %v92 = vadd.f32 %v91, %v58
    %v93 = vadd.f32 %v92, %v62
    %v94 = vadd.f32 %v93, %v66
    %v95 = vadd.f32 %v31, %v73
    %v96 = vadd.f32 %v32, %v80
    %v97 = vadd.f32 %v33, %v87
    %v98 = vadd.f32 %v34, %v94
    %99 = vst [vmem:[#allocation2] sm:$0xff] %v95
    %100 = vst [vmem:[#allocation2 + $0x8] sm:$0xff] %v96
    %101 = vst [vmem:[#allocation2 + $0x10] sm:$0xff] %v97
    %102 = vst [vmem:[#allocation2 + $0x18] sm:$0xff] %v98
    // Predicated region
    $region14: #{tpu_custom_call.1} parent=1 // pred_check
      %p103 = pneg %p23
    $region15: #{tpu_custom_call.1} parent=1 // pred_check_branch
      %105 = sbr.rel (%p103) target = $region17
    $region16: #{tpu_custom_call.1} parent=1 // pred_region
      %v106 = vld [vmem:[#allocation2] sm:$0xff]
      %v107 = vld [vmem:[#allocation2 + $0x8] sm:$0xff]
      %v108 = vld [vmem:[#allocation2 + $0x10] sm:$0xff]
      %v109 = vld [vmem:[#allocation2 + $0x18] sm:$0xff]
      %110 = vst [vmem:[#allocation6] sm:$0xff] %v106
      %111 = vst [vmem:[#allocation6 + $0x8] sm:$0xff] %v107
      %112 = vst [vmem:[#allocation6 + $0x10] sm:$0xff] %v108
      %113 = vst [vmem:[#allocation6 + $0x18] sm:$0xff] %v109
    $region17: #{tpu_custom_call.1} parent=1 // pred_fallthru
      _
    // Predicated region
    $region18: #{tpu_custom_call.1} parent=1 // pred_check
      _
    $region19: #{tpu_custom_call.1} parent=1 // pred_check_branch
      %115 = sbr.rel (0) target = $region21
    $region20: #{tpu_custom_call.1} parent=1 // pred_region
      %s117 = ssub.s32 512, 512
      %118 = vsyncadd [#allocation5], %s117
      %s120 = sshll.u32 [#allocation6], 4
      %s121 = int_to_ptr.vmem [resolvable:$true] %s120
      %123 = dma.vmem_to_hbm [thread:$0]  %s121, 512, %s1, [#allocation5]
    $region21: #{tpu_custom_call.1} parent=1 // pred_fallthru
      _
    // Predicated region
    $region22: #{tpu_custom_call.1} parent=1 // pred_check
      _
    $region23: #{tpu_custom_call.1} parent=1 // pred_check_branch
      %125 = sbr.rel (0) target = $region25
    $region24: #{tpu_custom_call.1} parent=1 // pred_region
      %126 = dma.done [#allocation5], 512
    $region25: #{tpu_custom_call.1} parent=1 // pred_fallthru
      _
    %127 = vsyncpa [#allocation4], 1
    %128 = vsyncpa [#allocation5], 1

</llo_original>
